<compile_context>
chip_gen: v5e
topology: v5e:2x2
jax: 0.10.0
libtpu: 0.0.40
codegen_flags: <defaults>
</compile_context>

<pallas_src>
import functools

import jax
import jax.numpy as jnp
from jax import lax
from jax.experimental import pallas as pl
from jax.experimental.pallas import tpu as pltpu

LANE = 128             # vreg lane count (last-dim tile)
OUT_SUB = 8            # sublane rows of each per-block partial-sum tile
MAX_BLOCK_ROWS = 4096  # rows (x128 lanes) per grid step; 2 MiB per f32 block,
                       # 8 MiB total with double-buffered inputs.


def _dice_bce_partial_kernel(x_ref, t_ref, out_ref, *,
                             n_valid, block_rows, needs_mask):
    """Per-block per-lane partial sums: rows = [inter, sum(p)+sum(t), sum(BCE)]."""
    x = x_ref[...].astype(jnp.float32)
    t = t_ref[...].astype(jnp.float32)

    if needs_mask:
        # Only the ragged tail (wrapper pad and/or partial last block whose
        # out-of-bounds rows hold unspecified data) is invalid.  Replace
        # invalid logits with -1e4 (sigmoid -> 0, BCE -> 0) and targets with 0
        # so those elements contribute exactly zero to every sum.
        step = pl.program_id(0)
        row = lax.broadcasted_iota(jnp.int32, x.shape, 0)
        col = lax.broadcasted_iota(jnp.int32, x.shape, 1)
        flat = step * (block_rows * LANE) + row * LANE + col
        valid = flat < n_valid
        x = jnp.where(valid, x, -1e4)
        t = jnp.where(valid, t, 0.0)

    p = jax.nn.sigmoid(x)

    # PyTorch F.binary_cross_entropy clamps the log terms at -100.
    log_p = jnp.maximum(jnp.log(p), -100.0)
    log_1mp = jnp.maximum(jnp.log(1.0 - p), -100.0)
    bce_elem = -(t * log_p + (1.0 - t) * log_1mp)

    # Sublane-axis reductions only (no cross-lane XLU reduce in-kernel).
    inter_l = jnp.sum(p * t, axis=0)        # (LANE,)
    pt_l = jnp.sum(p + t, axis=0)           # (LANE,)  sum(p)+sum(t) merged
    bce_l = jnp.sum(bce_elem, axis=0)       # (LANE,)

    sub = lax.broadcasted_iota(jnp.int32, (OUT_SUB, LANE), 0)
    out = jnp.where(sub == 0, inter_l[None, :],
          jnp.where(sub == 1, pt_l[None, :],
          jnp.where(sub == 2, bce_l[None, :], 0.0)))
    out_ref[...] = out


def dice_bce_loss(inputs, targets, smooth=1.0, *, max_block_rows=MAX_BLOCK_ROWS):
    """Pallas TPU implementation of DiceBCELoss.forward (returns scalar f32)."""
    x = inputs.reshape(-1)
    t = targets.reshape(-1)
    n = x.shape[0]

    rem = n % LANE
    if rem:  # only pad (<=127 elements) when the flat size is ragged
        pad = LANE - rem
        x = jnp.pad(x, (0, pad))
        t = jnp.pad(t, (0, pad))

    rows = x.shape[0] // LANE
    x2 = x.reshape(rows, LANE)   # free for contiguous arrays
    t2 = t.reshape(rows, LANE)

    # Full-array block when it fits (always legal), else fixed big blocks.
    block_rows = rows if rows <= max_block_rows else max_block_rows
    num_blocks = pl.cdiv(rows, block_rows)
    needs_mask = (num_blocks * block_rows * LANE) != n

    kernel = functools.partial(
        _dice_bce_partial_kernel,
        n_valid=int(n), block_rows=int(block_rows), needs_mask=bool(needs_mask))

    in_spec = pl.BlockSpec((block_rows, LANE), lambda i: (i, 0))
    partials = pl.pallas_call(
        kernel,
        out_shape=jax.ShapeDtypeStruct((num_blocks * OUT_SUB, LANE), jnp.float32),
        grid_spec=pltpu.PrefetchScalarGridSpec(
            num_scalar_prefetch=0,
            grid=(num_blocks,),
            in_specs=[in_spec, in_spec],
            out_specs=pl.BlockSpec((OUT_SUB, LANE), lambda i: (i, 0)),
        ),
        compiler_params=pltpu.CompilerParams(
            dimension_semantics=("parallel",),
            vmem_limit_bytes=32 << 20),
    )(x2, t2)

    # Tiny cross-block + cross-lane combine and scalar dice/BCE math in JAX.
    sums = jnp.sum(partials.reshape(num_blocks, OUT_SUB, LANE), axis=(0, 2))
    inter, pt_sum, bce_sum = sums[0], sums[1], sums[2]

    dice = 1.0 - (2.0 * inter + smooth) / (pt_sum + smooth)
    bce_mean = bce_sum / n
    return bce_mean + dice


def dice_bce_loss_ref(inputs, targets, smooth=1.0):
    """Pure-JAX reference mirroring the PyTorch forward."""
    p = jax.nn.sigmoid(inputs.reshape(-1).astype(jnp.float32))
    t = targets.reshape(-1).astype(jnp.float32)
    inter = jnp.sum(p * t)
    dice = 1.0 - (2.0 * inter + smooth) / (jnp.sum(p) + jnp.sum(t) + smooth)
    log_p = jnp.maximum(jnp.log(p), -100.0)
    log_1mp = jnp.maximum(jnp.log(1.0 - p), -100.0)
    bce = jnp.mean(-(t * log_p + (1.0 - t) * log_1mp))
    return bce + dice


if __name__ == "__main__":
    key = jax.random.PRNGKey(0)
    k1, k2, k3, k4 = jax.random.split(key, 4)

    # Primary case: NCHW logits/targets (matches the segmentation use case).
    B, C, H, W = 2, 4, 16, 16
    inputs = jax.random.normal(k1, (B, C, H, W), dtype=jnp.float32)      # logits
    targets = jax.random.bernoulli(k2, p=0.3, shape=(B, C, H, W)).astype(jnp.float32)

    loss = jax.block_until_ready(dice_bce_loss(inputs, targets, smooth=1.0))
    ref = jax.block_until_ready(dice_bce_loss_ref(inputs, targets, smooth=1.0))
    assert jnp.allclose(loss, ref, rtol=1e-5, atol=1e-5), (loss, ref)

    # Multi-block path (grid > 1, "parallel" per-block partial sums).
    loss_mb = jax.block_until_ready(
        dice_bce_loss(inputs, targets, smooth=1.0, max_block_rows=8))
    assert jnp.allclose(loss_mb, ref, rtol=1e-5, atol=1e-5), (loss_mb, ref)

    # Ragged path (n % 128 != 0 -> minimal pad + in-kernel tail mask).
    inputs_r = jax.random.normal(k3, (1, 1, 30, 30), dtype=jnp.float32)
    targets_r = jax.random.bernoulli(k4, p=0.3, shape=(1, 1, 30, 30)).astype(jnp.float32)
    loss_r = jax.block_until_ready(dice_bce_loss(inputs_r, targets_r, smooth=1.0))
    ref_r = jax.block_until_ready(dice_bce_loss_ref(inputs_r, targets_r, smooth=1.0))
    assert jnp.allclose(loss_r, ref_r, rtol=1e-5, atol=1e-5), (loss_r, ref_r)

    # Ragged + multi-block path (partial last block garbage must be masked).
    loss_rmb = jax.block_until_ready(
        dice_bce_loss(inputs_r, targets_r, smooth=1.0, max_block_rows=8))
    assert jnp.allclose(loss_rmb, ref_r, rtol=1e-5, atol=1e-5), (loss_rmb, ref_r)

    print("KERNEL_OK")
</pallas_src>

<mosaic_0001>
module attributes {stable_mosaic.version = 11 : i64} {
  func.func @_dice_bce_partial_kernel(%arg0: i32, %arg1: memref<16x128xf32, #tpu.memory_space<vmem>>, %arg2: memref<16x128xf32, #tpu.memory_space<vmem>>, %arg3: memref<8x128xf32, #tpu.memory_space<vmem>>) attributes {dimension_semantics = [#tpu.dimension_semantics<parallel>], iteration_bounds = array<i64: 1>, scalar_prefetch = 0 : i64, scratch_operands = 0 : i64, tpu.core_type = #tpu.core_type<tc>, window_params = [{transform_indices = @transform_0, window_bounds = array<i64: 16, 128>}, {transform_indices = @transform_1, window_bounds = array<i64: 16, 128>}, {transform_indices = @transform_2, window_bounds = array<i64: 8, 128>}]} {
    %c0 = arith.constant 0 : index
    %c0_0 = arith.constant 0 : index
    %0 = vector.load %arg1[%c0, %c0_0] : memref<16x128xf32, #tpu.memory_space<vmem>>, vector<16x128xf32>
    %c0_1 = arith.constant 0 : index
    %c0_2 = arith.constant 0 : index
    %1 = vector.load %arg2[%c0_1, %c0_2] : memref<16x128xf32, #tpu.memory_space<vmem>>, vector<16x128xf32>
    %2 = arith.negf %0 : vector<16x128xf32>
    %3 = math.exp %2 : vector<16x128xf32>
    %cst = arith.constant 1.000000e+00 : f32
    %4 = vector.broadcast %cst : f32 to vector<16x128xf32>
    %5 = arith.addf %4, %3 : vector<16x128xf32>
    %6 = arith.divf %4, %5 : vector<16x128xf32>
    %7 = math.log %6 : vector<16x128xf32>
    %cst_3 = arith.constant -1.000000e+02 : f32
    %8 = vector.broadcast %cst_3 : f32 to vector<16x128xf32>
    %9 = arith.maximumf %7, %8 : vector<16x128xf32>
    %cst_4 = arith.constant 1.000000e+00 : f32
    %10 = vector.broadcast %cst_4 : f32 to vector<16x128xf32>
    %11 = arith.subf %10, %6 : vector<16x128xf32>
    %12 = math.log %11 : vector<16x128xf32>
    %cst_5 = arith.constant -1.000000e+02 : f32
    %13 = vector.broadcast %cst_5 : f32 to vector<16x128xf32>
    %14 = arith.maximumf %12, %13 : vector<16x128xf32>
    %15 = arith.mulf %1, %9 : vector<16x128xf32>
    %cst_6 = arith.constant 1.000000e+00 : f32
    %16 = vector.broadcast %cst_6 : f32 to vector<16x128xf32>
    %17 = arith.subf %16, %1 : vector<16x128xf32>
    %18 = arith.mulf %17, %14 : vector<16x128xf32>
    %19 = arith.addf %15, %18 : vector<16x128xf32>
    %cst_7 = arith.constant 0.000000e+00 : f32
    %20 = vector.broadcast %cst_7 : f32 to vector<16x128xf32>
    %21 = arith.subf %20, %19 : vector<16x128xf32>
    %22 = arith.mulf %6, %1 : vector<16x128xf32>
    %cst_8 = arith.constant dense<0.000000e+00> : vector<128xf32>
    %23 = vector.multi_reduction <add>, %22, %cst_8 [0] : vector<16x128xf32> to vector<128xf32>
    %24 = arith.addf %6, %1 : vector<16x128xf32>
    %cst_9 = arith.constant dense<0.000000e+00> : vector<128xf32>
    %25 = vector.multi_reduction <add>, %24, %cst_9 [0] : vector<16x128xf32> to vector<128xf32>
    %cst_10 = arith.constant dense<0.000000e+00> : vector<128xf32>
    %26 = vector.multi_reduction <add>, %21, %cst_10 [0] : vector<16x128xf32> to vector<128xf32>
    %27 = tpu.iota {dimensions = array<i32: 0>} : vector<8x128xi32>
    %c0_i32 = arith.constant 0 : i32
    %28 = vector.broadcast %c0_i32 : i32 to vector<8x128xi32>
    %29 = arith.cmpi eq, %27, %28 : vector<8x128xi32>
    %30 = vector.shape_cast %23 : vector<128xf32> to vector<1x128xf32>
    %c1_i32 = arith.constant 1 : i32
    %31 = vector.broadcast %c1_i32 : i32 to vector<8x128xi32>
    %32 = arith.cmpi eq, %27, %31 : vector<8x128xi32>
    %33 = vector.shape_cast %25 : vector<128xf32> to vector<1x128xf32>
    %c2_i32 = arith.constant 2 : i32
    %34 = vector.broadcast %c2_i32 : i32 to vector<8x128xi32>
    %35 = arith.cmpi eq, %27, %34 : vector<8x128xi32>
    %36 = vector.shape_cast %26 : vector<128xf32> to vector<1x128xf32>
    %cst_11 = arith.constant 0.000000e+00 : f32
    %37 = vector.shape_cast %36 : vector<1x128xf32> to vector<1x128xf32>
    %38 = vector.broadcast %37 : vector<1x128xf32> to vector<8x128xf32>
    %39 = vector.broadcast %cst_11 : f32 to vector<8x128xf32>
    %40 = arith.select %35, %38, %39 : vector<8x128xi1>, vector<8x128xf32>
    %41 = vector.shape_cast %33 : vector<1x128xf32> to vector<1x128xf32>
    %42 = vector.broadcast %41 : vector<1x128xf32> to vector<8x128xf32>
    %43 = arith.select %32, %42, %40 : vector<8x128xi1>, vector<8x128xf32>
    %44 = vector.shape_cast %30 : vector<1x128xf32> to vector<1x128xf32>
    %45 = vector.broadcast %44 : vector<1x128xf32> to vector<8x128xf32>
    %46 = arith.select %29, %45, %43 : vector<8x128xi1>, vector<8x128xf32>
    %c0_12 = arith.constant 0 : index
    %c0_13 = arith.constant 0 : index
    %47 = vector.load %arg3[%c0_12, %c0_13] : memref<8x128xf32, #tpu.memory_space<vmem>>, vector<8x128xf32>
    tpu.vector_store %arg3[%c0_12, %c0_13], %46 {strides = array<i32>} : memref<8x128xf32, #tpu.memory_space<vmem>>, vector<8x128xf32>,
    return
  }
  func.func @transform_0(%arg0: i32) -> (i32, i32) {
    %c0_i32 = arith.constant 0 : i32
    %c0_i32_0 = arith.constant 0 : i32
    return %arg0, %c0_i32 : i32, i32
  }
  func.func @transform_1(%arg0: i32) -> (i32, i32) {
    %c0_i32 = arith.constant 0 : i32
    %c0_i32_0 = arith.constant 0 : i32
    return %arg0, %c0_i32 : i32, i32
  }
  func.func @transform_2(%arg0: i32) -> (i32, i32) {
    %c0_i32 = arith.constant 0 : i32
    %c0_i32_0 = arith.constant 0 : i32
    return %arg0, %c0_i32 : i32, i32
  }
}

</mosaic_0001>

<llo_original>
// kernel: tpu_custom_call.1
$region0: #{tpu_custom_call.1}
  #allocation0 [shape = 'u32[]', space=smem, size = 0x4, offset = 0x4, fixed_abs, tag = 'smem constant byte address 0x4 - core index']
  #allocation1 [shape = 'u32[72,128]{1,0:T(1,128)}', space=vmem, size = 0x9000, scoped, tag = 'internal scratch']
  %s0 = inlined_call_operand.hbm [shape: f32[16,128], index: 0, kind: input, shape index: {}]
  %s1 = inlined_call_operand.hbm [shape: f32[16,128], index: 1, kind: input, shape index: {}]
  %s2 = inlined_call_operand.hbm [shape: f32[8,128], index: 2, kind: output, shape index: {}]
  %s3 = sld [smem:[#allocation0]]
  $region26: #{tpu_custom_call.1} parent=0
    _
  %s5 = ssub.s32 1, %s3
  %s6 = scalar_select 0, %s5, %s3
  $region1: #{tpu_custom_call.1} parent=0
    #allocation2 [shape = 'u8[8192]{0}', space=vmem, size = 0x2000, scoped, tag = 'input window, operand 0, single buffered']
    #allocation3 [shape = 's32[1]{0}', space=sflag, size = 0x4, scoped, tag = 'scoped memory for tpu_custom_call.1']
    #allocation4 [shape = 's32[1]{0}', space=sflag, size = 0x4, scoped, tag = 'scoped memory for tpu_custom_call.1']
    #allocation5 [shape = 'u8[8192]{0}', space=vmem, size = 0x2000, scoped, tag = 'input window, operand 1, single buffered']
    #allocation6 [shape = 's32[1]{0}', space=sflag, size = 0x4, scoped, tag = 'scoped memory for tpu_custom_call.1']
    #allocation7 [shape = 'u8[4096]{0}', space=vmem, size = 0x1000, scoped, tag = 'output window, operand 0, single buffered']
    %7 = vsyncpa [#allocation3], 0
    %8 = vsyncpa [#allocation6], 0
    %9 = vsyncpa [#allocation4], 0
    // Predicated region
    $region2: #{tpu_custom_call.1} parent=1 // pred_check
      _
    $region3: #{tpu_custom_call.1} parent=1 // pred_check_branch
      %11 = sbr.rel (0) target = $region5
    $region4: #{tpu_custom_call.1} parent=1 // pred_region
      %13 = vsyncadd [#allocation3], 0
      %s14 = sshll.u32 %s0, 4
      %s15 = int_to_ptr.hbm [resolvable:$true] %s14
      %s16 = sshll.u32 [#allocation2], 4
      %s17 = int_to_ptr.vmem [resolvable:$true] %s16
      %22 = dma.hbm_to_vmem [thread:$0]  %s15, 256, %s17, [#allocation3], 128, 128, 8
    $region5: #{tpu_custom_call.1} parent=1 // pred_fallthru
      _
    // Predicated region
    $region6: #{tpu_custom_call.1} parent=1 // pred_check
      _
    $region7: #{tpu_custom_call.1} parent=1 // pred_check_branch
      %24 = sbr.rel (0) target = $region9
    $region8: #{tpu_custom_call.1} parent=1 // pred_region
      %26 = vsyncadd [#allocation6], 0
      %s27 = sshll.u32 %s1, 4
      %s28 = int_to_ptr.hbm [resolvable:$true] %s27
      %s29 = sshll.u32 [#allocation5], 4
      %s30 = int_to_ptr.vmem [resolvable:$true] %s29
      %35 = dma.hbm_to_vmem [thread:$0]  %s28, 256, %s30, [#allocation6], 128, 128, 8
    $region9: #{tpu_custom_call.1} parent=1 // pred_fallthru
      _
    // Predicated region
    $region10: #{tpu_custom_call.1} parent=1 // pred_check
      _
    $region11: #{tpu_custom_call.1} parent=1 // pred_check_branch
      %37 = sbr.rel (0) target = $region13
    $region12: #{tpu_custom_call.1} parent=1 // pred_region
      %39 = dma.done [#allocation3], 256
    $region13: #{tpu_custom_call.1} parent=1 // pred_fallthru
      _
    // Predicated region
    $region14: #{tpu_custom_call.1} parent=1 // pred_check
      _
    $region15: #{tpu_custom_call.1} parent=1 // pred_check_branch
      %41 = sbr.rel (0) target = $region17
    $region16: #{tpu_custom_call.1} parent=1 // pred_region
      %43 = dma.done [#allocation6], 256
    $region17: #{tpu_custom_call.1} parent=1 // pred_fallthru
      _
    %v44 = vld [vmem:[#allocation2] sm:$0xff]
    %v45 = vld [vmem:[#allocation2 + $0x8] sm:$0xff]
    %v46 = vld [vmem:[#allocation5] sm:$0xff]
    %v47 = vld [vmem:[#allocation5 + $0x8] sm:$0xff]
    %v48 = vxor.u32 %v44, 2147483648
    %v49 = vxor.u32 %v45, 2147483648
    %v50 = vmul.f32 %v48, 1.442695
    %v51 = vpow.pop %v50
    %v52 = vmul.f32 %v49, 1.442695
    %v53 = vpow.pop %v52
    %v54 = vadd.f32 %v51, 1.0
    %v55 = vadd.f32 %v53, 1.0
    %v56 = vrcp.pop %v54
    %v57 = vmul.f32 %v54, %v56
    %v58 = vsub.f32 1.0, %v57
    %v59 = vmul.f32 %v56, %v58
    %v60 = vadd.f32 %v56, %v59
    %vm61 = vweird.f32 %v54
    %vm62 = vweird.f32 %v56
    %vm63 = vmor %vm61, %vm62
    %v64 = vsel %vm63, %v56, %v60
    %v65 = vand.u32 2147483647, %v54
    %vm66 = vcmp.eq.f32.partialorder %v65, 8.507059e+37
    %v67 = vand.u32 %v54, 2147483648
    %v68 = vor.u32 1.1754944e-38, %v67
    %v69 = vsel %vm66, %v68, %v64
    %v70 = vmul.f32 1.0, %v69
    %v71 = vrcp.pop %v55
    %v72 = vmul.f32 %v55, %v71
    %v73 = vsub.f32 1.0, %v72
    %v74 = vmul.f32 %v71, %v73
    %v75 = vadd.f32 %v71, %v74
    %vm76 = vweird.f32 %v55
    %vm77 = vweird.f32 %v71
    %vm78 = vmor %vm76, %vm77
    %v79 = vsel %vm78, %v71, %v75
    %v80 = vand.u32 2147483647, %v55
    %vm81 = vcmp.eq.f32.partialorder %v80, 8.507059e+37
    %v82 = vand.u32 %v55, 2147483648
    %v83 = vor.u32 1.1754944e-38, %v82
    %v84 = vsel %vm81, %v83, %v79
    %v85 = vmul.f32 1.0, %v84
    %v86 = vlog2.pop %v70
    %v87 = vmul.f32 %v86, 0.6931472
    %v88 = vlog2.pop %v85
    %v89 = vmul.f32 %v88, 0.6931472
    %v90 = vmax.f32 %v87, -100.0
    %v91 = vmax.f32 %v89, -100.0
    %v92 = vsub.f32 1.0, %v70
    %v93 = vsub.f32 1.0, %v85
    %v94 = vlog2.pop %v92
    %v95 = vmul.f32 %v94, 0.6931472
    %v96 = vlog2.pop %v93
    %v97 = vmul.f32 %v96, 0.6931472
    %v98 = vmax.f32 %v95, -100.0
    %v99 = vmax.f32 %v97, -100.0
    %v100 = vmul.f32 %v46, %v90
    %v101 = vmul.f32 %v47, %v91
    %v102 = vsub.f32 1.0, %v46
    %v103 = vsub.f32 1.0, %v47
    %v104 = vmul.f32 %v102, %v98
    %v105 = vmul.f32 %v103, %v99
    %v106 = vadd.f32 %v100, %v104
    %v107 = vadd.f32 %v101, %v105
    %v108 = vsub.f32 0.0, %v106
    %v109 = vsub.f32 0.0, %v107
    %v110 = vmul.f32 %v70, %v46
    %v111 = vmul.f32 %v85, %v47
    %v112 = vadd.f32 %v110, %v111
    %v113 = vrot.slane %v112, 4
    %v114 = vadd.f32 %v112, %v113
    %v115 = vrot.slane %v114, 2
    %v116 = vadd.f32 %v114, %v115
    %v117 = vrot.slane %v116, 1
    %v118 = vadd.f32 %v116, %v117
    %v119 = vadd.f32 %v70, %v46
    %v120 = vadd.f32 %v85, %v47
    %v121 = vadd.f32 %v119, %v120
    %v122 = vrot.slane %v121, 4
    %v123 = vadd.f32 %v121, %v122
    %v124 = vrot.slane %v123, 2
    %v125 = vadd.f32 %v123, %v124
    %v126 = vrot.slane %v125, 1
    %v127 = vadd.f32 %v125, %v126
    %v128 = vadd.f32 %v108, %v109
    %v129 = vrot.slane %v128, 4
    %v130 = vadd.f32 %v128, %v129
    %v131 = vrot.slane %v130, 2
    %v132 = vadd.f32 %v130, %v131
    %v133 = vrot.slane %v132, 1
    %v134 = vadd.f32 %v132, %v133
    %v135 = vlaneseq
    %v136 = vshrl.u32 %v135, 7
    %vm137 = vcmp.eq.s32.totalorder %v136, 0
    %vm138 = vcmp.eq.s32.totalorder %v136, 1
    %vm139 = vcmp.eq.s32.totalorder %v136, 2
    %v140 = vsel %vm139, %v134, 0.0
    %v141 = vsel %vm138, %v127, %v140
    %v142 = vsel %vm137, %v118, %v141
    %143 = vst [vmem:[#allocation7] sm:$0xff] %v142
    // Predicated region
    $region18: #{tpu_custom_call.1} parent=1 // pred_check
      _
    $region19: #{tpu_custom_call.1} parent=1 // pred_check_branch
      %145 = sbr.rel (0) target = $region21
    $region20: #{tpu_custom_call.1} parent=1 // pred_region
      %147 = vsyncadd [#allocation4], 0
      %s149 = sshll.u32 [#allocation7], 4
      %s150 = int_to_ptr.vmem [resolvable:$true] %s149
      %s151 = sshll.u32 %s2, 4
      %s152 = int_to_ptr.hbm [resolvable:$true] %s151
      %154 = dma.vmem_to_hbm [thread:$0]  %s150, 128, %s152, [#allocation4]
    $region21: #{tpu_custom_call.1} parent=1 // pred_fallthru
      _
    // Predicated region
    $region22: #{tpu_custom_call.1} parent=1 // pred_check
      _
    $region23: #{tpu_custom_call.1} parent=1 // pred_check_branch
      %156 = sbr.rel (0) target = $region25
    $region24: #{tpu_custom_call.1} parent=1 // pred_region
      %158 = dma.done [#allocation4], 128
    $region25: #{tpu_custom_call.1} parent=1 // pred_fallthru
      _
    %159 = vsyncpa [#allocation3], 1
    %160 = vsyncpa [#allocation6], 1
    %161 = vsyncpa [#allocation4], 1

</llo_original>
